<compile_context>
chip_gen: v7x
topology: tpu7x:2x2x1
jax: 0.10.0
libtpu: 0.0.40
codegen_flags: <defaults>
</compile_context>

<pallas_src>
import jax
import jax.numpy as jnp
from jax.experimental import pallas as pl
from jax.experimental.pallas import tpu as pltpu


def policy_net_kernel(xT_ref, w1T_ref, b1_ref, w2T_ref, b2_ref, oT_ref):
    # xT_ref:  [S, TB]   (batch on the lane axis)
    # w1T_ref: [H, S]    b1_ref: [H, 1]
    # w2T_ref: [A, H]    b2_ref: [A, 1]
    # oT_ref:  [A, TB]
    xT = xT_ref[...]

    # hidden^T = relu(W1^T @ x^T + b1)            -> [H, TB]
    h = jnp.dot(w1T_ref[...], xT, preferred_element_type=jnp.float32) + b1_ref[...]
    h = jnp.maximum(h, 0.0)

    # logits^T = W2^T @ h^T + b2                  -> [A, TB]
    logits = jnp.dot(w2T_ref[...], h, preferred_element_type=jnp.float32) + b2_ref[...]

    # numerically-stable softmax over the action axis (sublane axis, size A)
    m = jnp.max(logits, axis=0, keepdims=True)
    e = jnp.exp(logits - m)
    denom = jnp.sum(e, axis=0, keepdims=True)
    inv = pl.reciprocal(denom, approx=False)      # exact: keeps sum(probs)==1 to 1e-5
    oT_ref[...] = (e * inv).astype(oT_ref.dtype)


def policy_network_forward(x, w1, b1, w2, b2, *, tb=512):
    """x: [B, state_size]; w1: [state_size, 24]; b1: [24];
    w2: [24, action_size]; b2: [action_size]  ->  probs: [B, action_size]

    Internally runs feature-major (batch on the lane axis) and tiles the batch.
    """
    B, S = x.shape
    H = w1.shape[1]
    A = w2.shape[1]

    # Feature-major layout (layout plumbing only; math is identical).
    xT = x.T                      # [S, B]
    w1T = w1.T                    # [H, S]
    w2T = w2.T                    # [A, H]
    b1c = b1.reshape(H, 1)        # broadcast along lanes inside the kernel
    b2c = b2.reshape(A, 1)

    # Batch tile: multiple of 128 lanes; don't overshoot for tiny B.
    tb = min(tb, pl.cdiv(B, 128) * 128)
    Bp = pl.cdiv(B, tb) * tb
    if Bp != B:
        # Zero-pad extra batch columns; they flow through harmlessly and are
        # sliced off below.
        xT = jnp.pad(xT, ((0, 0), (0, Bp - B)))

    grid = (Bp // tb,)

    probsT = pl.pallas_call(
        policy_net_kernel,
        out_shape=jax.ShapeDtypeStruct((A, Bp), jnp.float32),
        grid=grid,
        in_specs=[
            pl.BlockSpec((S, tb), lambda i: (0, i)),   # x^T: tiled over batch lanes
            pl.BlockSpec((H, S), lambda i: (0, 0)),    # W1^T: resident
            pl.BlockSpec((H, 1), lambda i: (0, 0)),    # b1:   resident
            pl.BlockSpec((A, H), lambda i: (0, 0)),    # W2^T: resident
            pl.BlockSpec((A, 1), lambda i: (0, 0)),    # b2:   resident
        ],
        out_specs=pl.BlockSpec((A, tb), lambda i: (0, i)),
        compiler_params=pltpu.CompilerParams(
            dimension_semantics=("parallel",),         # megacore sharding on v7x
        ),
    )(xT, w1T, b1c, w2T, b2c)

    return probsT[:, :B].T                             # back to [B, action_size]


if __name__ == "__main__":
    # Shapes consistent with the module's forward pass (hidden=24 is fixed by
    # nn.Linear(state_size, 24)). Batch chosen to exercise multi-step grid +
    # the padded final tile (300 -> 3 tiles of 128).
    batch = 300
    state_size = 8
    hidden = 24
    action_size = 4

    key = jax.random.PRNGKey(0)
    k_x, k_w1, k_b1, k_w2, k_b2 = jax.random.split(key, 5)

    # Deterministic synthetic parameters (PyTorch-style weight shapes, then
    # laid out as [in, out] for x @ W + b).
    x = jax.random.normal(k_x, (batch, state_size), dtype=jnp.float32)
    w1_torch = jax.random.normal(k_w1, (hidden, state_size), dtype=jnp.float32) * 0.1   # fc1.weight
    b1 = jax.random.normal(k_b1, (hidden,), dtype=jnp.float32) * 0.1                    # fc1.bias
    w2_torch = jax.random.normal(k_w2, (action_size, hidden), dtype=jnp.float32) * 0.1  # fc2.weight
    b2 = jax.random.normal(k_b2, (action_size,), dtype=jnp.float32) * 0.1               # fc2.bias

    w1 = w1_torch.T  # [state_size, 24]
    w2 = w2_torch.T  # [24, action_size]

    probs = policy_network_forward(x, w1, b1, w2, b2, tb=128)
    jax.block_until_ready(probs)

    # Reference check in plain JAX (same math as the PyTorch module).
    h_ref = jnp.maximum(x @ w1 + b1[None, :], 0.0)
    logits_ref = h_ref @ w2 + b2[None, :]
    probs_ref = jax.nn.softmax(logits_ref, axis=-1)

    assert probs.shape == (batch, action_size)
    assert jnp.allclose(probs, probs_ref, atol=1e-5, rtol=1e-5)
    assert jnp.allclose(jnp.sum(probs, axis=-1), 1.0, atol=1e-5)

    print("KERNEL_OK")
</pallas_src>

<mosaic_0001>
module attributes {stable_mosaic.version = 11 : i64} {
  func.func @policy_net_kernel(%arg0: i32, %arg1: memref<8x128xf32, #tpu.memory_space<vmem>>, %arg2: memref<24x8xf32, #tpu.memory_space<vmem>>, %arg3: memref<24x1xf32, #tpu.memory_space<vmem>>, %arg4: memref<4x24xf32, #tpu.memory_space<vmem>>, %arg5: memref<4x1xf32, #tpu.memory_space<vmem>>, %arg6: memref<4x128xf32, #tpu.memory_space<vmem>>) attributes {dimension_semantics = [#tpu.dimension_semantics<parallel>], iteration_bounds = array<i64: 3>, scalar_prefetch = 0 : i64, scratch_operands = 0 : i64, tpu.core_type = #tpu.core_type<tc>, window_params = [{transform_indices = @transform_0, window_bounds = array<i64: 8, 128>}, {pipeline_mode = #tpu.pipeline_mode<synchronous>, transform_indices = @transform_1, window_bounds = array<i64: 24, 8>}, {pipeline_mode = #tpu.pipeline_mode<synchronous>, transform_indices = @transform_2, window_bounds = array<i64: 24, 1>}, {pipeline_mode = #tpu.pipeline_mode<synchronous>, transform_indices = @transform_3, window_bounds = array<i64: 4, 24>}, {pipeline_mode = #tpu.pipeline_mode<synchronous>, transform_indices = @transform_4, window_bounds = array<i64: 4, 1>}, {transform_indices = @transform_5, window_bounds = array<i64: 4, 128>}]} {
    %c0 = arith.constant 0 : index
    %c0_0 = arith.constant 0 : index
    %0 = vector.load %arg1[%c0, %c0_0] : memref<8x128xf32, #tpu.memory_space<vmem>>, vector<8x128xf32>
    %c0_1 = arith.constant 0 : index
    %c0_2 = arith.constant 0 : index
    %1 = vector.load %arg2[%c0_1, %c0_2] : memref<24x8xf32, #tpu.memory_space<vmem>>, vector<24x8xf32>
    %cst = arith.constant dense<0.000000e+00> : vector<24x128xf32>
    %2 = tpu.matmul %1, %0, %cst {dimension_numbers = #tpu.dot_dimension_numbers<[1], [0], [0], [1], [0, 0, 1, 1], [], []>} : vector<24x8xf32>, vector<8x128xf32>, vector<24x128xf32> -> vector<24x128xf32>
    %c0_3 = arith.constant 0 : index
    %c0_4 = arith.constant 0 : index
    %3 = vector.load %arg3[%c0_3, %c0_4] : memref<24x1xf32, #tpu.memory_space<vmem>>, vector<24x1xf32>
    %4 = vector.broadcast %3 : vector<24x1xf32> to vector<24x128xf32>
    %5 = arith.addf %2, %4 : vector<24x128xf32>
    %cst_5 = arith.constant 0.000000e+00 : f32
    %6 = vector.broadcast %cst_5 : f32 to vector<24x128xf32>
    %7 = arith.maximumf %5, %6 : vector<24x128xf32>
    %c0_6 = arith.constant 0 : index
    %c0_7 = arith.constant 0 : index
    %8 = vector.load %arg4[%c0_6, %c0_7] : memref<4x24xf32, #tpu.memory_space<vmem>>, vector<4x24xf32>
    %cst_8 = arith.constant dense<0.000000e+00> : vector<4x128xf32>
    %9 = tpu.matmul %8, %7, %cst_8 {dimension_numbers = #tpu.dot_dimension_numbers<[1], [0], [0], [1], [0, 0, 1, 1], [], []>} : vector<4x24xf32>, vector<24x128xf32>, vector<4x128xf32> -> vector<4x128xf32>
    %c0_9 = arith.constant 0 : index
    %c0_10 = arith.constant 0 : index
    %10 = vector.load %arg5[%c0_9, %c0_10] : memref<4x1xf32, #tpu.memory_space<vmem>>, vector<4x1xf32>
    %11 = vector.broadcast %10 : vector<4x1xf32> to vector<4x128xf32>
    %12 = arith.addf %9, %11 : vector<4x128xf32>
    %cst_11 = arith.constant dense<0xFF800000> : vector<128xf32>
    %13 = vector.multi_reduction <maximumf>, %12, %cst_11 [0] : vector<4x128xf32> to vector<128xf32>
    %14 = vector.shape_cast %13 : vector<128xf32> to vector<1x128xf32>
    %15 = vector.broadcast %14 : vector<1x128xf32> to vector<4x128xf32>
    %16 = arith.subf %12, %15 : vector<4x128xf32>
    %17 = math.exp %16 : vector<4x128xf32>
    %cst_12 = arith.constant dense<0.000000e+00> : vector<128xf32>
    %18 = vector.multi_reduction <add>, %17, %cst_12 [0] : vector<4x128xf32> to vector<128xf32>
    %19 = vector.shape_cast %18 : vector<128xf32> to vector<1x128xf32>
    %20 = tpu.reciprocal %19 : vector<1x128xf32> -> vector<1x128xf32>
    %21 = vector.broadcast %20 : vector<1x128xf32> to vector<4x128xf32>
    %22 = arith.mulf %17, %21 : vector<4x128xf32>
    %c0_13 = arith.constant 0 : index
    %c0_14 = arith.constant 0 : index
    %23 = vector.load %arg6[%c0_13, %c0_14] : memref<4x128xf32, #tpu.memory_space<vmem>>, vector<4x128xf32>
    tpu.vector_store %arg6[%c0_13, %c0_14], %22 {strides = array<i32>} : memref<4x128xf32, #tpu.memory_space<vmem>>, vector<4x128xf32>,
    return
  }
  func.func @transform_0(%arg0: i32) -> (i32, i32) {
    %c0_i32 = arith.constant 0 : i32
    %c0_i32_0 = arith.constant 0 : i32
    return %c0_i32, %arg0 : i32, i32
  }
  func.func @transform_1(%arg0: i32) -> (i32, i32) {
    %c0_i32 = arith.constant 0 : i32
    %c0_i32_0 = arith.constant 0 : i32
    %c0_i32_1 = arith.constant 0 : i32
    return %c0_i32, %c0_i32_0 : i32, i32
  }
  func.func @transform_2(%arg0: i32) -> (i32, i32) {
    %c0_i32 = arith.constant 0 : i32
    %c0_i32_0 = arith.constant 0 : i32
    %c0_i32_1 = arith.constant 0 : i32
    return %c0_i32, %c0_i32_0 : i32, i32
  }
  func.func @transform_3(%arg0: i32) -> (i32, i32) {
    %c0_i32 = arith.constant 0 : i32
    %c0_i32_0 = arith.constant 0 : i32
    %c0_i32_1 = arith.constant 0 : i32
    return %c0_i32, %c0_i32_0 : i32, i32
  }
  func.func @transform_4(%arg0: i32) -> (i32, i32) {
    %c0_i32 = arith.constant 0 : i32
    %c0_i32_0 = arith.constant 0 : i32
    %c0_i32_1 = arith.constant 0 : i32
    return %c0_i32, %c0_i32_0 : i32, i32
  }
  func.func @transform_5(%arg0: i32) -> (i32, i32) {
    %c0_i32 = arith.constant 0 : i32
    %c0_i32_0 = arith.constant 0 : i32
    return %c0_i32, %arg0 : i32, i32
  }
}

</mosaic_0001>

<llo_original>
// kernel: tpu_custom_call.1
$region0: #{tpu_custom_call.1}
  #allocation0 [shape = 'u32[]', space=smem, size = 0x4, offset = 0x4, fixed_abs, tag = 'smem constant byte address 0x4 - core index']
  #allocation1 [shape = 'u32[144,128]{1,0:T(1,128)}', space=vmem, size = 0x12000, scoped, tag = 'internal scratch']
  %s0 = inlined_call_operand.vmem [shape: f32[8,384], index: 0, kind: input, shape index: {}]
  %s1 = inlined_call_operand.vmem [shape: f32[24,8], index: 1, kind: input, shape index: {}]
  %s2 = inlined_call_operand.vmem [shape: f32[24,1], index: 2, kind: input, shape index: {}]
  %s3 = inlined_call_operand.vmem [shape: f32[4,24], index: 3, kind: input, shape index: {}]
  %s4 = inlined_call_operand.vmem [shape: f32[4,1], index: 4, kind: input, shape index: {}]
  %s5 = inlined_call_operand.hbm [shape: f32[4,384], index: 5, kind: output, shape index: {}]
  %s6 = sld [smem:[#allocation0]]
  $region53: #{tpu_custom_call.1} parent=0
    _
  %s8 = ssub.s32 1, %s6
  %s9 = scalar_select 0, %s8, %s6
  $region1: #{tpu_custom_call.1} parent=0
    #allocation2 [shape = 'u8[4096]{0}', space=vmem, size = 0x1000, scoped, tag = 'output window, operand 0']
    #allocation3 [shape = 's32[2]{0}', space=sflag, size = 0x8, scoped, tag = 'scoped memory for tpu_custom_call.1']
    %10 = vsyncpa [#allocation3], 0
    %s11 = scalar_lea.sflag [#allocation3], 1
    %12 = vsyncpa %s11, 0
    loop: start=0, step=1, limit=5
    $region2: #{tpu_custom_call.1} parent=1 // loop_pre_header
      _
    $region3: #{tpu_custom_call.1} parent=1 // loop_header
      %s14 = sphi 0, %s18
      %p15 = scmp.ge.s32.totalorder %s14, 5
      %s24 = sphi 0, %s26
      %s27 = sphi 0, %s24
      %s28 = sphi 0, %s27
      %s44 = sphi 0, %s28
      %s48 = sphi 0, %s48
      %s50 = sphi 0, %s48
      %s51 = sphi 0, %s50
      %s65 = sphi 0, %s51
      %s69 = sphi 0, %s69
      %s71 = sphi 0, %s69
      %s72 = sphi 0, %s71
      %s86 = sphi 0, %s72
      %s90 = sphi 0, %s90
      %s92 = sphi 0, %s90
      %s93 = sphi 0, %s92
      %s107 = sphi 0, %s93
      %s111 = sphi 0, %s111
      %s113 = sphi 0, %s111
      %s114 = sphi 0, %s113
      %s128 = sphi 0, %s114
      %s134 = sphi 0, %s136
      %s137 = sphi 0, %s134
      %s138 = sphi 0, %s137
      %s154 = sphi 0, %s138
    $region4: #{tpu_custom_call.1} parent=1 // loop_header_branch
      %17 = sbr.rel (%p15) target = $region8
    $region5: #{tpu_custom_call.1} parent=1 // loop_body
      %s19 = ssub.s32 %s14, 1
      %s20 = ssub.s32 %s14, 2
      %s21 = sadd.s32 %s14, 1
      %s22 = ssub.s32 %s14, %s21
      %p23 = scmp.eq.s32.totalorder %s22, 0
      %s25 = sadd.s32 %s24, 1
      %s26 = scalar_select %p23, %s24, %s25
      %p29 = pneg %p23
      %p30 = scmp.eq.s32.totalorder %s14, 2
      %p31 = por %p29, %p30
      %p32 = scmp.ne.s32.totalorder %s24, %s27
      %p33 = scmp.eq.s32.totalorder %s14, 0
      %p34 = por %p32, %p33
      %p35 = scmp.ne.s32.totalorder %s24, %s27
      %p36 = scmp.eq.s32.totalorder %s19, 2
      %p37 = por %p35, %p36
      %p38 = scmp.ne.s32.totalorder %s27, %s28
      %p39 = scmp.eq.s32.totalorder %s19, 0
      %p40 = por %p38, %p39
      %p41 = scmp.ne.s32.totalorder %s27, %s28
      %p42 = scmp.eq.s32.totalorder %s20, 2
      %p43 = por %p41, %p42
      %p45 = scmp.ne.s32.totalorder %s28, %s44
      %p46 = scmp.eq.s32.totalorder %s20, 0
      %p47 = por %p45, %p46
      %s49 = sadd.s32 %s48, 1
      %p52 = scmp.eq.s32.totalorder %s14, 2
      %p53 = scmp.ne.s32.totalorder %s48, %s50
      %p54 = scmp.eq.s32.totalorder %s14, 0
      %p55 = por %p53, %p54
      %p56 = scmp.ne.s32.totalorder %s48, %s50
      %p57 = scmp.eq.s32.totalorder %s19, 2
      %p58 = por %p56, %p57
      %p59 = scmp.ne.s32.totalorder %s50, %s51
      %p60 = scmp.eq.s32.totalorder %s19, 0
      %p61 = por %p59, %p60
      %p62 = scmp.ne.s32.totalorder %s50, %s51
      %p63 = scmp.eq.s32.totalorder %s20, 2
      %p64 = por %p62, %p63
      %p66 = scmp.ne.s32.totalorder %s51, %s65
      %p67 = scmp.eq.s32.totalorder %s20, 0
      %p68 = por %p66, %p67
      %s70 = sadd.s32 %s69, 1
      %p73 = scmp.eq.s32.totalorder %s14, 2
      %p74 = scmp.ne.s32.totalorder %s69, %s71
      %p75 = scmp.eq.s32.totalorder %s14, 0
      %p76 = por %p74, %p75
      %p77 = scmp.ne.s32.totalorder %s69, %s71
      %p78 = scmp.eq.s32.totalorder %s19, 2
      %p79 = por %p77, %p78
      %p80 = scmp.ne.s32.totalorder %s71, %s72
      %p81 = scmp.eq.s32.totalorder %s19, 0
      %p82 = por %p80, %p81
      %p83 = scmp.ne.s32.totalorder %s71, %s72
      %p84 = scmp.eq.s32.totalorder %s20, 2
      %p85 = por %p83, %p84
      %p87 = scmp.ne.s32.totalorder %s72, %s86
      %p88 = scmp.eq.s32.totalorder %s20, 0
      %p89 = por %p87, %p88
      %s91 = sadd.s32 %s90, 1
      %p94 = scmp.eq.s32.totalorder %s14, 2
      %p95 = scmp.ne.s32.totalorder %s90, %s92
      %p96 = scmp.eq.s32.totalorder %s14, 0
      %p97 = por %p95, %p96
      %p98 = scmp.ne.s32.totalorder %s90, %s92
      %p99 = scmp.eq.s32.totalorder %s19, 2
      %p100 = por %p98, %p99
      %p101 = scmp.ne.s32.totalorder %s92, %s93
      %p102 = scmp.eq.s32.totalorder %s19, 0
      %p103 = por %p101, %p102
      %p104 = scmp.ne.s32.totalorder %s92, %s93
      %p105 = scmp.eq.s32.totalorder %s20, 2
      %p106 = por %p104, %p105
      %p108 = scmp.ne.s32.totalorder %s93, %s107
      %p109 = scmp.eq.s32.totalorder %s20, 0
      %p110 = por %p108, %p109
      %s112 = sadd.s32 %s111, 1
      %p115 = scmp.eq.s32.totalorder %s14, 2
      %p116 = scmp.ne.s32.totalorder %s111, %s113
      %p117 = scmp.eq.s32.totalorder %s14, 0
      %p118 = por %p116, %p117
      %p119 = scmp.ne.s32.totalorder %s111, %s113
      %p120 = scmp.eq.s32.totalorder %s19, 2
      %p121 = por %p119, %p120
      %p122 = scmp.ne.s32.totalorder %s113, %s114
      %p123 = scmp.eq.s32.totalorder %s19, 0
      %p124 = por %p122, %p123
      %p125 = scmp.ne.s32.totalorder %s113, %s114
      %p126 = scmp.eq.s32.totalorder %s20, 2
      %p127 = por %p125, %p126
      %p129 = scmp.ne.s32.totalorder %s114, %s128
      %p130 = scmp.eq.s32.totalorder %s20, 0
      %p131 = por %p129, %p130
      %s132 = ssub.s32 %s14, %s21
      %p133 = scmp.eq.s32.totalorder %s132, 0
      %s135 = sadd.s32 %s134, 1
      %s136 = scalar_select %p133, %s134, %s135
      %p139 = pneg %p133
      %p140 = scmp.eq.s32.totalorder %s14, 2
      %p141 = por %p139, %p140
      %p142 = scmp.ne.s32.totalorder %s134, %s137
      %p143 = scmp.eq.s32.totalorder %s14, 0
      %p144 = por %p142, %p143
      %p145 = scmp.ne.s32.totalorder %s134, %s137
      %p146 = scmp.eq.s32.totalorder %s19, 2
      %p147 = por %p145, %p146
      %p148 = scmp.ne.s32.totalorder %s137, %s138
      %p149 = scmp.eq.s32.totalorder %s19, 0
      %p150 = por %p148, %p149
      %p151 = scmp.ne.s32.totalorder %s137, %s138
      %p152 = scmp.eq.s32.totalorder %s20, 2
      %p153 = por %p151, %p152
      %p155 = scmp.ne.s32.totalorder %s138, %s154
      %p156 = scmp.eq.s32.totalorder %s20, 0
      %p157 = por %p155, %p156
      %p158 = scmp.le.s32.totalorder 1, %s14
      %p159 = scmp.lt.s32.totalorder %s14, 4
      %p160 = pnand %p158, %p159
      %p161 = pneg %p160
      // Predicated region
      $region9: #{tpu_custom_call.1} parent=5 // pred_check
        _
      $region10: #{tpu_custom_call.1} parent=5 // pred_check_branch
        %163 = sbr.rel (%p160) target = $region12
      $region11: #{tpu_custom_call.1} parent=5 // pred_region
        %s164 = ssub.s32 %s14, 1
        // Predicated region
        $region13: #{tpu_custom_call.1} parent=11 // pred_check
          %p165 = pneg %p61
        $region14: #{tpu_custom_call.1} parent=11 // pred_check_branch
          %167 = sbr.rel (%p165) target = $region16
        $region15: #{tpu_custom_call.1} parent=11 // pred_region
          _
        $region16: #{tpu_custom_call.1} parent=11 // pred_fallthru
          _
        // Predicated region
        $region17: #{tpu_custom_call.1} parent=11 // pred_check
          %p168 = pneg %p82
        $region18: #{tpu_custom_call.1} parent=11 // pred_check_branch
          %170 = sbr.rel (%p168) target = $region20
        $region19: #{tpu_custom_call.1} parent=11 // pred_region
          _
        $region20: #{tpu_custom_call.1} parent=11 // pred_fallthru
          _
        // Predicated region
        $region21: #{tpu_custom_call.1} parent=11 // pred_check
          %p171 = pneg %p103
        $region22: #{tpu_custom_call.1} parent=11 // pred_check_branch
          %173 = sbr.rel (%p171) target = $region24
        $region23: #{tpu_custom_call.1} parent=11 // pred_region
          _
        $region24: #{tpu_custom_call.1} parent=11 // pred_fallthru
          _
        // Predicated region
        $region25: #{tpu_custom_call.1} parent=11 // pred_check
          %p174 = pneg %p124
        $region26: #{tpu_custom_call.1} parent=11 // pred_check_branch
          %176 = sbr.rel (%p174) target = $region28
        $region27: #{tpu_custom_call.1} parent=11 // pred_region
          _
        $region28: #{tpu_custom_call.1} parent=11 // pred_fallthru
          _
      $region12: #{tpu_custom_call.1} parent=5 // pred_fallthru
        _
      %p177 = scmp.lt.s32.totalorder %s14, 3
      // Predicated region
      $region29: #{tpu_custom_call.1} parent=5 // pred_check
        %p178 = pneg %p177
      $region30: #{tpu_custom_call.1} parent=5 // pred_check_branch
        %180 = sbr.rel (%p178) target = $region32
      $region31: #{tpu_custom_call.1} parent=5 // pred_region
        // Predicated region
        $region33: #{tpu_custom_call.1} parent=31 // pred_check
          %p181 = pneg %p34
        $region34: #{tpu_custom_call.1} parent=31 // pred_check_branch
          %183 = sbr.rel (%p181) target = $region36
        $region35: #{tpu_custom_call.1} parent=31 // pred_region
          %p184 = scmp.lt.s32.totalorder %s14, 2
          %s185 = scalar_select %p184, %s14, 2
          %s186 = smul.addr %s185, 8
          %s187 = scalar_lea.vmem %s0, %s186
        $region36: #{tpu_custom_call.1} parent=31 // pred_fallthru
          _
      $region32: #{tpu_custom_call.1} parent=5 // pred_fallthru
        _
      %p188 = scmp.le.s32.totalorder 1, %s14
      %p189 = scmp.lt.s32.totalorder %s14, 4
      %p190 = pnand %p188, %p189
      %p191 = pneg %p190
      // Predicated region
      $region37: #{tpu_custom_call.1} parent=5 // pred_check
        _
      $region38: #{tpu_custom_call.1} parent=5 // pred_check_branch
        %193 = sbr.rel (%p190) target = $region40
      $region39: #{tpu_custom_call.1} parent=5 // pred_region
        %s194 = ssub.s32 %s14, 1
        %p195 = scmp.lt.s32.totalorder %s19, 2
        %s196 = scalar_select %p195, %s19, 2
        %s197 = smul.addr %s196, 8
        %s198 = scalar_lea.vmem %s0, %s197
        %p199 = pneg %p40
        %p200 = pneg %p37
        %p201 = pneg %p61
        %p202 = pneg %p58
        %p203 = pneg %p82
        %p204 = pneg %p79
        %p205 = pneg %p103
        %p206 = pneg %p100
        %p207 = pneg %p124
        %p208 = pneg %p121
        %p209 = pneg %p150
        %p210 = pneg %p147
        %s211 = sand.u32 %s137, 1
        %s212 = scalar_lea.sflag [#allocation3], %s211
        %s213 = sand.u32 %s137, 1
        %s214 = smul.addr %s213, 4
        %s215 = scalar_lea.vmem [#allocation2], %s214
        %p216 = scmp.lt.s32.totalorder %s19, 2
        %s217 = scalar_select %p216, %s19, 2
        %s218 = smul.addr %s217, 8
        %s219 = scalar_lea.vmem %s0, %s218
        %v220 = vld [vmem:[%s219] sm:$0xff]
        %v221 = vld [vmem:[%s1] sm:$0xff]
        %v222 = vld [vmem:[%s1 + $0x8] sm:$0xff]
        %v223 = vld [vmem:[%s1 + $0x10] sm:$0xff]
        %v224 = vld [vmem:[%s2] sm:$0xff]
        %v225 = vld [vmem:[%s2 + $0x8] sm:$0xff]
        %v226 = vld [vmem:[%s2 + $0x10] sm:$0xff]
        %228 = vset.pattern.permute.xlu0 0
        %229 = vperm.xlu0 %228, %v224
        %v230 = vpop.permute.xlu0 %229
        %233 = vset.pattern.permute.xlu0 0
        %234 = vperm.xlu0 %233, %v225
        %v235 = vpop.permute.xlu0 %234
        %238 = vset.pattern.permute.xlu0 0
        %239 = vperm.xlu0 %238, %v226
        %v240 = vpop.permute.xlu0 %239
        %vm242 = vcmask 64512
        %v244 = vsel %vm242, %v221, 0
        %v247 = vsel %vm242, %v222, 0
        %v250 = vsel %vm242, %v223, 0
        %252 = vmatprep.subr.mxu0 0.0
        %253 = vmatpush1.msra.mxu0 %v220
        %254 = vmatprep.subr.mxu0 0.0
        %255 = vmatpush1.msra.mxu0 0.0
        %256 = vmatprep.subr.mxu0 0.0
        %257 = vmatpush1.msra.mxu0 0.0
        %258 = vmatprep.subr.mxu0 0.0
        %259 = vmatpush1.msra.mxu0 0.0
        %260 = vmatprep.subr.mxu0 0.0
        %261 = vmatpush1.msra.mxu0 0.0
        %262 = vmatprep.subr.mxu0 0.0
        %263 = vmatpush1.msra.mxu0 0.0
        %264 = vmatprep.subr.mxu0 0.0
        %265 = vmatpush1.msra.mxu0 0.0
        %266 = vmatprep.subr.mxu0 0.0
        %267 = vmatpush1.msra.mxu0 0.0
        %268 = vmatprep.subr.mxu0 0.0
        %269 = vmatpush1.msra.mxu0 0.0
        %270 = vmatprep.subr.mxu0 0.0
        %271 = vmatpush1.msra.mxu0 0.0
        %272 = vmatprep.subr.mxu0 0.0
        %273 = vmatpush1.msra.mxu0 0.0
        %274 = vmatprep.subr.mxu0 0.0
        %275 = vmatpush1.msra.mxu0 0.0
        %276 = vmatprep.subr.mxu0 0.0
        %277 = vmatpush1.msra.mxu0 0.0
        %278 = vmatprep.subr.mxu0 0.0
        %279 = vmatpush1.msra.mxu0 0.0
        %280 = vmatprep.subr.mxu0 0.0
        %281 = vmatpush1.msra.mxu0 0.0
        %282 = vmatprep.subr.mxu0 0.0
        %283 = vmatpush1.msra.mxu0 0.0
        %284 = vmatprep.subr.mxu0 0.0
        %285 = vmatpush1.msra.mxu0 0.0
        %286 = vmatprep.subr.mxu0 0.0
        %287 = vmatpush1.msra.mxu0 0.0
        %288 = vmatprep.subr.mxu0 0.0
        %289 = vmatpush1.msra.mxu0 0.0
        %290 = vmatprep.subr.mxu0 0.0
        %291 = vmatpush1.msra.mxu0 0.0
        %292 = vmatprep.subr.mxu0 0.0
        %293 = vmatpush1.msra.mxu0 0.0
        %294 = vmatprep.subr.mxu0 0.0
        %295 = vmatpush1.msra.mxu0 0.0
        %296 = vmatprep.subr.mxu0 0.0
        %297 = vmatpush1.msra.mxu0 0.0
        %298 = vmatprep.subr.mxu0 0.0
        %299 = vmatpush1.msra.mxu0 0.0
        %300 = vmatprep.subr.mxu0 0.0
        %301 = vmatpush1.msra.mxu0 0.0
        %302 = vmatprep.subr.mxu0 0.0
        %303 = vmatpush1.msra.mxu0 0.0
        %304 = vmatprep.subr.mxu0 0.0
        %305 = vmatpush1.msra.mxu0 0.0
        %306 = vmatprep.subr.mxu0 0.0
        %307 = vmatpush1.msra.mxu0 0.0
        %308 = vmatprep.subr.mxu0 0.0
        %309 = vmatpush1.msra.mxu0 0.0
        %310 = vmatprep.subr.mxu0 0.0
        %311 = vmatpush1.msra.mxu0 0.0
        %312 = vmatprep.subr.mxu0 0.0
        %313 = vmatpush1.msra.mxu0 0.0
        %314 = vmatprep.subr.mxu0 0.0
        %315 = vmatpush1.msra.mxu0 0.0
        %316 = vmatprep.mubr.f32.mxu0 0.0
        %317 = vmatmul.mubr.f32.gmra.mrb[0].mxu0 %v244
        %v318 = vpop.f32.mrb[0].mxu0
        %v319 = vadd.f32 %v230, %v318
        %v320 = vpop.f32.mrb[0].mxu0
        %321 = vmatprep.mubr.f32.mxu0 0.0
        %322 = vmatmul.mubr.f32.gmra.mrb[0].mxu0 %v247
        %v323 = vpop.f32.mrb[0].mxu0
        %v324 = vadd.f32 %v235, %v323
        %v325 = vpop.f32.mrb[0].mxu0
        %326 = vmatprep.mubr.f32.mxu0 0.0
        %327 = vmatmul.mubr.f32.gmra.mrb[0].mxu0 %v250
        %v328 = vpop.f32.mrb[0].mxu0
        %v329 = vadd.f32 %v240, %v328
        %v330 = vpop.f32.mrb[0].mxu0
        %331 = vdwg.mxu0
        %v332 = vmax.f32 %v319, 0.0
        %v333 = vmax.f32 %v324, 0.0
        %v334 = vmax.f32 %v329, 0.0
        %v335 = vld [vmem:[%s3] sm:$0xf]
        %v336 = vld [vmem:[%s4] sm:$0xf]
        %338 = vset.pattern.permute.xlu0 0
        %339 = vperm.xlu0 %338, %v336
        %v340 = vpop.permute.xlu0 %339
        %vm342 = vcmask 195584
        %v344 = vsel %vm342, %v335, 0
        %346 = vmatprep.subr.mxu0 0.0
        %347 = vmatpush1.msra.mxu0 %v332
        %348 = vmatprep.subr.mxu0 0.0
        %349 = vmatpush1.msra.mxu0 %v333
        %350 = vmatprep.subr.mxu0 0.0
        %351 = vmatpush1.msra.mxu0 %v334
        %352 = vmatprep.subr.mxu0 0.0
        %353 = vmatpush1.msra.mxu0 0.0
        %354 = vmatprep.subr.mxu0 0.0
        %355 = vmatpush1.msra.mxu0 0.0
        %356 = vmatprep.subr.mxu0 0.0
        %357 = vmatpush1.msra.mxu0 0.0
        %358 = vmatprep.subr.mxu0 0.0
        %359 = vmatpush1.msra.mxu0 0.0
        %360 = vmatprep.subr.mxu0 0.0
        %361 = vmatpush1.msra.mxu0 0.0
        %362 = vmatprep.subr.mxu0 0.0
        %363 = vmatpush1.msra.mxu0 0.0
        %364 = vmatprep.subr.mxu0 0.0
        %365 = vmatpush1.msra.mxu0 0.0
        %366 = vmatprep.subr.mxu0 0.0
        %367 = vmatpush1.msra.mxu0 0.0
        %368 = vmatprep.subr.mxu0 0.0
        %369 = vmatpush1.msra.mxu0 0.0
        %370 = vmatprep.subr.mxu0 0.0
        %371 = vmatpush1.msra.mxu0 0.0
        %372 = vmatprep.subr.mxu0 0.0
        %373 = vmatpush1.msra.mxu0 0.0
        %374 = vmatprep.subr.mxu0 0.0
        %375 = vmatpush1.msra.mxu0 0.0
        %376 = vmatprep.subr.mxu0 0.0
        %377 = vmatpush1.msra.mxu0 0.0
        %378 = vmatprep.subr.mxu0 0.0
        %379 = vmatpush1.msra.mxu0 0.0
        %380 = vmatprep.subr.mxu0 0.0
        %381 = vmatpush1.msra.mxu0 0.0
        %382 = vmatprep.subr.mxu0 0.0
        %383 = vmatpush1.msra.mxu0 0.0
        %384 = vmatprep.subr.mxu0 0.0
        %385 = vmatpush1.msra.mxu0 0.0
        %386 = vmatprep.subr.mxu0 0.0
        %387 = vmatpush1.msra.mxu0 0.0
        %388 = vmatprep.subr.mxu0 0.0
        %389 = vmatpush1.msra.mxu0 0.0
        %390 = vmatprep.subr.mxu0 0.0
        %391 = vmatpush1.msra.mxu0 0.0
        %392 = vmatprep.subr.mxu0 0.0
        %393 = vmatpush1.msra.mxu0 0.0
        %394 = vmatprep.subr.mxu0 0.0
        %395 = vmatpush1.msra.mxu0 0.0
        %396 = vmatprep.subr.mxu0 0.0
        %397 = vmatpush1.msra.mxu0 0.0
        %398 = vmatprep.subr.mxu0 0.0
        %399 = vmatpush1.msra.mxu0 0.0
        %400 = vmatprep.subr.mxu0 0.0
        %401 = vmatpush1.msra.mxu0 0.0
        %402 = vmatprep.subr.mxu0 0.0
        %403 = vmatpush1.msra.mxu0 0.0
        %404 = vmatprep.subr.mxu0 0.0
        %405 = vmatpush1.msra.mxu0 0.0
        %406 = vmatprep.subr.mxu0 0.0
        %407 = vmatpush1.msra.mxu0 0.0
        %408 = vmatprep.subr.mxu0 0.0
        %409 = vmatpush1.msra.mxu0 0.0
        %410 = vmatprep.mubr.f32.mxu0 0.0
        %411 = vmatmul.mubr.f32.gmra.mrb[0].mxu0 %v344
        %v412 = vpop.f32.mrb[0].mxu0
        %v413 = vadd.f32 %v340, %v412
        %v414 = vpop.f32.mrb[0].mxu0
        %415 = vdwg.mxu0
        %vm416 = vcmask 1043456
        %v417 = vsel %vm416, %v413, -inf
        %v418 = vrot.slane %v417, 4
        %v419 = vmax.f32 %v417, %v418
        %v420 = vrot.slane %v419, 2
        %v421 = vmax.f32 %v419, %v420
        %v422 = vrot.slane %v421, 1
        %v423 = vmax.f32 %v421, %v422
        %v424 = vsub.f32 %v413, %v423
        %v425 = vmul.f32 %v424, 1.442695
        %v426 = vpow.pop %v425
        %v427 = vsel %vm416, %v426, 0.0
        %v428 = vrot.slane %v427, 4
        %v429 = vadd.f32 %v427, %v428
        %v430 = vrot.slane %v429, 2
        %v431 = vadd.f32 %v429, %v430
        %v432 = vrot.slane %v431, 1
        %v433 = vadd.f32 %v431, %v432
        %v434 = vrcp.pop %v433
        %v435 = vmul.f32 %v426, %v434
        %436 = vst [vmem:[%s215] sm:$0xf] %v435
        %s437 = sand.u32 %s137, 1
        %s438 = scalar_lea.sflag [#allocation3], %s437
        %s439 = sand.u32 %s137, 1
        %s440 = smul.addr %s439, 4
        %s441 = scalar_lea.vmem [#allocation2], %s440
        // Predicated region
        $region41: #{tpu_custom_call.1} parent=39 // pred_check
          %p442 = pneg %p147
        $region42: #{tpu_custom_call.1} parent=39 // pred_check_branch
          %444 = sbr.rel (%p442) target = $region44
        $region43: #{tpu_custom_call.1} parent=39 // pred_region
          %s446 = ssub.s32 64, 64
          %447 = vsyncadd %s438, %s446
          %s448 = smul.addr %s19, 64
          %s449 = scalar_lea.hbm %s5, %s448
          %s451 = sshll.u32 %s441, 4
          %s452 = int_to_ptr.vmem [resolvable:$true] %s451
          %454 = dma.vmem_to_hbm [thread:$0]  %s452, 64, %s449, %s438
        $region44: #{tpu_custom_call.1} parent=39 // pred_fallthru
          _
      $region40: #{tpu_custom_call.1} parent=5 // pred_fallthru
        _
      %p455 = scmp.le.s32.totalorder 2, %s14
      // Predicated region
      $region45: #{tpu_custom_call.1} parent=5 // pred_check
        %p456 = pneg %p455
      $region46: #{tpu_custom_call.1} parent=5 // pred_check_branch
        %458 = sbr.rel (%p456) target = $region48
      $region47: #{tpu_custom_call.1} parent=5 // pred_region
        %s459 = ssub.s32 %s14, 2
        // Predicated region
        $region49: #{tpu_custom_call.1} parent=47 // pred_check
          %p460 = pneg %p153
        $region50: #{tpu_custom_call.1} parent=47 // pred_check_branch
          %462 = sbr.rel (%p460) target = $region52
        $region51: #{tpu_custom_call.1} parent=47 // pred_region
          %s463 = sand.u32 %s138, 1
          %s464 = scalar_lea.sflag [#allocation3], %s463
          %s465 = sand.u32 %s138, 1
          %s466 = smul.addr %s465, 4
          %s467 = scalar_lea.vmem [#allocation2], %s466
          %468 = dma.done %s464, 64
        $region52: #{tpu_custom_call.1} parent=47 // pred_fallthru
          _
      $region48: #{tpu_custom_call.1} parent=5 // pred_fallthru
        _
    $region6: #{tpu_custom_call.1} parent=1 // loop_footer
      %s18 = sadd.s32 1, %s14
    $region7: #{tpu_custom_call.1} parent=1 // loop_footer_branch
      %13 = sbr.rel target = $region3
    $region8: #{tpu_custom_call.1} parent=1 // loop_exit
      _
    %469 = vsyncpa [#allocation3], 1
    %s470 = scalar_lea.sflag [#allocation3], 1
    %471 = vsyncpa %s470, 1

</llo_original>
